<compile_context>
chip_gen: v6e
topology: v6e:2x2x1
jax: 0.10.0
libtpu: 0.0.40
codegen_flags: <defaults>
</compile_context>

<pallas_src>
import math

import jax
import jax.numpy as jnp
from jax.experimental import pallas as pl
from jax.experimental.pallas import tpu as pltpu

_C = 10.0
_LANES = 128
_TARGET_BLOCK_ELEMS = 8192 * 128        # ~4 MiB per f32 block per stream
_VMEM_LIMIT_BYTES = 48 * 1024 * 1024    # 3 streams x 2 buffers x 4 MiB + headroom
                                        # (still < v7x's 64 MiB physical VMEM)


def _round_up(v, m):
    return ((v + m - 1) // m) * m


def _ruber_kernel(x_ref, y_ref, o_ref):
    # Cast in-register (VPU), compute in f32, write back in the output dtype.
    # jnp broadcasting also handles the broadcast path, where x_ref is
    # (block_reps, rows, 128) and y_ref is (1, rows, 128).
    x = x_ref[...].astype(jnp.float32)
    y = y_ref[...].astype(jnp.float32)
    t = jnp.abs(x - y)
    # Guard the sqrt argument: negative for the (discarded) t < c branch and
    # for masked-off garbage in partial blocks.
    safe = jnp.maximum(2.0 * _C * t - _C * _C, 0.0)
    o_ref[...] = jnp.where(t < _C, t, jnp.sqrt(safe)).astype(o_ref.dtype)


def _pick_block_rows(rows, lanes):
    """Sublane block size: ~4 MiB of f32 per stream, multiple of 8 (or the
    full dim for tiny inputs), capped at ceil(rows/2) so the grid has >= 2
    parallel steps for v7x's two TensorCores whenever rows allows it."""
    if rows <= 8:
        return rows
    vmem_rows = max(8, (_TARGET_BLOCK_ELEMS // max(lanes, 1)) // 8 * 8)
    split_rows = _round_up(pl.cdiv(rows, 2), 8)
    return min(vmem_rows, split_rows)


def _run_2d(x2, y2, out_dtype):
    """Elementwise kernel on a (rows, lanes) view; grid over sublane blocks."""
    rows, lanes = x2.shape
    block_rows = _pick_block_rows(rows, lanes)
    grid = (pl.cdiv(rows, block_rows),)   # partial last block handled by Pallas
    n = rows * lanes
    bytes_accessed = n * (x2.dtype.itemsize + y2.dtype.itemsize
                          + jnp.dtype(out_dtype).itemsize)
    return pl.pallas_call(
        _ruber_kernel,
        out_shape=jax.ShapeDtypeStruct((rows, lanes), out_dtype),
        grid_spec=pltpu.PrefetchScalarGridSpec(
            num_scalar_prefetch=0,
            grid=grid,
            in_specs=[
                pl.BlockSpec((block_rows, lanes), lambda i: (i, 0)),
                pl.BlockSpec((block_rows, lanes), lambda i: (i, 0)),
            ],
            out_specs=pl.BlockSpec((block_rows, lanes), lambda i: (i, 0)),
        ),
        compiler_params=pltpu.CompilerParams(
            dimension_semantics=("parallel",),
            vmem_limit_bytes=_VMEM_LIMIT_BYTES,
        ),
        cost_estimate=pl.CostEstimate(
            flops=7 * n, transcendentals=n, bytes_accessed=bytes_accessed),
    )(x2, y2)


def _run_bcast(big3, small3, out_dtype):
    """big3: (reps, small_rows, 128) view of the full-size operand;
    small3: (1, small_rows, 128) view of the broadcast operand.  The small
    operand's index_map ignores the repetition grid axis, so it is DMA'd once
    per small-block and stays resident in VMEM across the inner axis -- the
    broadcast is never materialized in HBM."""
    reps, small_rows, lanes = big3.shape
    max_rows = _TARGET_BLOCK_ELEMS // _LANES             # 8192
    br = min(_round_up(small_rows, 8), max_rows)
    block_reps = max(1, min(pl.cdiv(reps, 2), max_rows // br))
    grid = (pl.cdiv(small_rows, br), pl.cdiv(reps, block_reps))
    n = reps * small_rows * lanes
    bytes_accessed = (n * (big3.dtype.itemsize + jnp.dtype(out_dtype).itemsize)
                      + small_rows * lanes * small3.dtype.itemsize)
    return pl.pallas_call(
        _ruber_kernel,
        out_shape=jax.ShapeDtypeStruct((reps, small_rows, lanes), out_dtype),
        grid_spec=pltpu.PrefetchScalarGridSpec(
            num_scalar_prefetch=0,
            grid=grid,
            in_specs=[
                pl.BlockSpec((block_reps, br, lanes), lambda i, r: (r, i, 0)),
                pl.BlockSpec((1, br, lanes), lambda i, r: (0, i, 0)),
            ],
            out_specs=pl.BlockSpec((block_reps, br, lanes), lambda i, r: (r, i, 0)),
        ),
        compiler_params=pltpu.CompilerParams(
            dimension_semantics=("parallel", "parallel"),
            vmem_limit_bytes=_VMEM_LIMIT_BYTES,
        ),
        cost_estimate=pl.CostEstimate(
            flops=7 * n, transcendentals=n, bytes_accessed=bytes_accessed),
    )(big3, small3)


def _leading_broadcast(small_shape, out_shape):
    """If small_shape broadcasts against out_shape only over leading axes
    (trailing axes match exactly), return (reps, m) with m = small element
    count; otherwise None."""
    k = len(out_shape) - len(small_shape)
    if k < 0:
        return None
    pad = (1,) * k + tuple(small_shape)
    for s in range(len(out_shape) + 1):
        if any(d != 1 for d in pad[:s]):
            break
        if tuple(pad[s:]) == tuple(out_shape[s:]):
            return math.prod(out_shape[:s]), math.prod(out_shape[s:])
    return None


def _elementwise(x, y, out_shape, out_dtype, n):
    """Run the kernel on two already-equal-sized operands (views are free)."""
    if n % _LANES == 0:
        # Lane-dense fast path: free reshape of contiguous data.
        rows = n // _LANES
        out2 = _run_2d(x.reshape(rows, _LANES), y.reshape(rows, _LANES), out_dtype)
        return out2.reshape(out_shape)
    # Ragged: collapse leading dims into sublanes, keep the natural last dim
    # as lanes (a full-extent lane block is always legal).  Zero extra copies.
    last = out_shape[-1] if out_shape else 1
    if last <= _TARGET_BLOCK_ELEMS // 8:     # keep worst-case block <= ~4 MiB
        rows = n // last
        out2 = _run_2d(x.reshape(rows, last), y.reshape(rows, last), out_dtype)
        return out2.reshape(out_shape)
    # Pathological: enormous ragged last dim.  Pad once (extra copies).
    # TODO(synk): block the lane axis with masked partial blocks instead.
    n_pad = pl.cdiv(n, _LANES) * _LANES
    xf = jnp.pad(x.reshape(-1), (0, n_pad - n))
    yf = jnp.pad(y.reshape(-1), (0, n_pad - n))
    out2 = _run_2d(xf.reshape(-1, _LANES), yf.reshape(-1, _LANES), out_dtype)
    return out2.reshape(-1)[:n].reshape(out_shape)


def ruber_loss_pallas(x, y):
    """Elementwise ruber loss (the reduction-free, target-without-grad path of
    RuberLoss.forward).  bf16 inputs give bf16 output (half the HBM traffic);
    the math is always done in f32 in-register."""
    out_shape = jnp.broadcast_shapes(x.shape, y.shape)
    out_dtype = jnp.result_type(x.dtype, y.dtype)
    n = math.prod(out_shape)
    if n == 0:
        return jnp.zeros(out_shape, out_dtype)

    if x.shape != out_shape or y.shape != out_shape:
        # |x - y| is symmetric, so operand order does not matter.
        if x.shape == out_shape or y.shape == out_shape:
            big, small = (x, y) if x.shape == out_shape else (y, x)
            lb = _leading_broadcast(small.shape, out_shape)
            if lb is not None:
                reps, m = lb
                if reps == 1:
                    # Same element count, just a rank / unit-dim difference.
                    return _elementwise(big, small.reshape(out_shape),
                                        out_shape, out_dtype, n)
                if m % _LANES == 0:
                    small_rows = m // _LANES
                    out3 = _run_bcast(
                        big.reshape(reps, small_rows, _LANES),
                        small.reshape(1, small_rows, _LANES), out_dtype)
                    return out3.reshape(out_shape)
        # TODO(synk): mutual / interior / lane-ragged broadcasts still
        # materialize the expansion in HBM; extend with per-dim index_map
        # pinning if these shapes ever matter.
        x = jnp.broadcast_to(x, out_shape)
        y = jnp.broadcast_to(y, out_shape)

    return _elementwise(x, y, out_shape, out_dtype, n)


def _ruber_ref(x, y):
    xb, yb = jnp.broadcast_arrays(x, y)
    t = jnp.abs(xb.astype(jnp.float32) - yb.astype(jnp.float32))
    out = jnp.where(t < _C, t, jnp.sqrt(jnp.maximum(2.0 * _C * t - _C * _C, 0.0)))
    return out.astype(jnp.result_type(x.dtype, y.dtype))


if __name__ == "__main__":
    key = jax.random.PRNGKey(0)
    k1, k2, k3, k4, k5 = jax.random.split(key, 5)

    # NCHW example, scaled so both branches of the `where` are exercised.
    x = jax.random.normal(k1, (2, 4, 16, 16), dtype=jnp.float32) * 20.0
    y = jax.random.normal(k2, (2, 4, 16, 16), dtype=jnp.float32) * 20.0
    out = jax.block_until_ready(ruber_loss_pallas(x, y))
    ref = _ruber_ref(x, y)
    assert out.shape == ref.shape and out.dtype == ref.dtype
    assert jnp.allclose(out, ref, atol=1e-5, rtol=1e-5), "mismatch (fast path)"

    # Ragged length (n % 128 != 0): copy-free (rows, last_dim) path.
    xr = jax.random.normal(k3, (3, 5, 7), dtype=jnp.float32) * 20.0
    yr = jax.random.normal(k4, (3, 5, 7), dtype=jnp.float32) * 20.0
    out_r = jax.block_until_ready(ruber_loss_pallas(xr, yr))
    ref_r = _ruber_ref(xr, yr)
    assert out_r.shape == ref_r.shape
    assert jnp.allclose(out_r, ref_r, atol=1e-5, rtol=1e-5), "mismatch (ragged path)"

    # Broadcast target (module warns but still supports it): fed via its own
    # index_map, never materialized in HBM.
    yb = jax.random.normal(k4, (4, 16, 16), dtype=jnp.float32) * 20.0
    out_b = jax.block_until_ready(ruber_loss_pallas(x, yb))
    ref_b = _ruber_ref(x, yb)
    assert out_b.shape == ref_b.shape
    assert jnp.allclose(out_b, ref_b, atol=1e-5, rtol=1e-5), "mismatch (broadcast path)"

    # bf16 in -> bf16 out (half the HBM traffic; math still f32 in-register).
    xh = (jax.random.normal(k5, (2, 4, 16, 16), dtype=jnp.float32) * 20.0).astype(jnp.bfloat16)
    yh = y.astype(jnp.bfloat16)
    out_h = jax.block_until_ready(ruber_loss_pallas(xh, yh))
    ref_h = _ruber_ref(xh, yh)
    assert out_h.dtype == jnp.bfloat16 and out_h.shape == ref_h.shape
    assert jnp.allclose(out_h.astype(jnp.float32), ref_h.astype(jnp.float32),
                        atol=1e-1, rtol=1e-2), "mismatch (bf16 path)"

    print("KERNEL_OK")
</pallas_src>

<mosaic_0001>
module attributes {stable_mosaic.version = 11 : i64} {
  func.func @_ruber_kernel(%arg0: i32, %arg1: memref<8x128xf32, #tpu.memory_space<vmem>>, %arg2: memref<8x128xf32, #tpu.memory_space<vmem>>, %arg3: memref<8x128xf32, #tpu.memory_space<vmem>>) attributes {dimension_semantics = [#tpu.dimension_semantics<parallel>], iteration_bounds = array<i64: 2>, scalar_prefetch = 0 : i64, scratch_operands = 0 : i64, tpu.core_type = #tpu.core_type<tc>, window_params = [{transform_indices = @transform_0, window_bounds = array<i64: 8, 128>}, {transform_indices = @transform_1, window_bounds = array<i64: 8, 128>}, {transform_indices = @transform_2, window_bounds = array<i64: 8, 128>}]} {
    %c0 = arith.constant 0 : index
    %c0_0 = arith.constant 0 : index
    %0 = vector.load %arg1[%c0, %c0_0] : memref<8x128xf32, #tpu.memory_space<vmem>>, vector<8x128xf32>
    %c0_1 = arith.constant 0 : index
    %c0_2 = arith.constant 0 : index
    %1 = vector.load %arg2[%c0_1, %c0_2] : memref<8x128xf32, #tpu.memory_space<vmem>>, vector<8x128xf32>
    %2 = arith.subf %0, %1 : vector<8x128xf32>
    %3 = math.absf %2 : vector<8x128xf32>
    %cst = arith.constant 2.000000e+01 : f32
    %4 = vector.broadcast %cst : f32 to vector<8x128xf32>
    %5 = arith.mulf %4, %3 : vector<8x128xf32>
    %cst_3 = arith.constant 1.000000e+02 : f32
    %6 = vector.broadcast %cst_3 : f32 to vector<8x128xf32>
    %7 = arith.subf %5, %6 : vector<8x128xf32>
    %cst_4 = arith.constant 0.000000e+00 : f32
    %8 = vector.broadcast %cst_4 : f32 to vector<8x128xf32>
    %9 = arith.maximumf %7, %8 : vector<8x128xf32>
    %cst_5 = arith.constant 1.000000e+01 : f32
    %10 = vector.broadcast %cst_5 : f32 to vector<8x128xf32>
    %11 = arith.cmpf olt, %3, %10 : vector<8x128xf32>
    %12 = math.sqrt %9 : vector<8x128xf32>
    %13 = arith.select %11, %3, %12 : vector<8x128xi1>, vector<8x128xf32>
    %c0_6 = arith.constant 0 : index
    %c0_7 = arith.constant 0 : index
    %14 = vector.load %arg3[%c0_6, %c0_7] : memref<8x128xf32, #tpu.memory_space<vmem>>, vector<8x128xf32>
    tpu.vector_store %arg3[%c0_6, %c0_7], %13 {strides = array<i32>} : memref<8x128xf32, #tpu.memory_space<vmem>>, vector<8x128xf32>,
    return
  }
  func.func @transform_0(%arg0: i32) -> (i32, i32) {
    %c0_i32 = arith.constant 0 : i32
    %c0_i32_0 = arith.constant 0 : i32
    return %arg0, %c0_i32 : i32, i32
  }
  func.func @transform_1(%arg0: i32) -> (i32, i32) {
    %c0_i32 = arith.constant 0 : i32
    %c0_i32_0 = arith.constant 0 : i32
    return %arg0, %c0_i32 : i32, i32
  }
  func.func @transform_2(%arg0: i32) -> (i32, i32) {
    %c0_i32 = arith.constant 0 : i32
    %c0_i32_0 = arith.constant 0 : i32
    return %arg0, %c0_i32 : i32, i32
  }
}

</mosaic_0001>

<llo_original>
// kernel: tpu_custom_call.1
$region0: #{tpu_custom_call.1}
  #allocation0 [shape = 'u32[]', space=smem, size = 0x4, offset = 0x4, fixed_abs, tag = 'smem constant byte address 0x4 - core index']
  #allocation1 [shape = 'u32[144,128]{1,0:T(1,128)}', space=vmem, size = 0x12000, scoped, tag = 'internal scratch']
  %s0 = inlined_call_operand.hbm [shape: f32[16,128], index: 0, kind: input, shape index: {}]
  %s1 = inlined_call_operand.hbm [shape: f32[16,128], index: 1, kind: input, shape index: {}]
  %s2 = inlined_call_operand.hbm [shape: f32[16,128], index: 2, kind: output, shape index: {}]
  %s3 = sld [smem:[#allocation0]]
  $region49: #{tpu_custom_call.1} parent=0
    _
  %s5 = ssub.s32 1, %s3
  %s6 = scalar_select 0, %s5, %s3
  $region1: #{tpu_custom_call.1} parent=0
    #allocation2 [shape = 'u8[8192]{0}', space=vmem, size = 0x2000, scoped, tag = 'input window, operand 0']
    #allocation3 [shape = 's32[2]{0}', space=sflag, size = 0x8, scoped, tag = 'scoped memory for tpu_custom_call.1']
    #allocation4 [shape = 's32[2]{0}', space=sflag, size = 0x8, scoped, tag = 'scoped memory for tpu_custom_call.1']
    #allocation5 [shape = 'u8[8192]{0}', space=vmem, size = 0x2000, scoped, tag = 'input window, operand 1']
    #allocation6 [shape = 's32[2]{0}', space=sflag, size = 0x8, scoped, tag = 'scoped memory for tpu_custom_call.1']
    #allocation7 [shape = 'u8[8192]{0}', space=vmem, size = 0x2000, scoped, tag = 'output window, operand 0']
    %7 = vsyncpa [#allocation3], 0
    %s8 = scalar_lea.sflag [#allocation3], 1
    %9 = vsyncpa %s8, 0
    %10 = vsyncpa [#allocation6], 0
    %s11 = scalar_lea.sflag [#allocation6], 1
    %12 = vsyncpa %s11, 0
    %13 = vsyncpa [#allocation4], 0
    %s14 = scalar_lea.sflag [#allocation4], 1
    %15 = vsyncpa %s14, 0
    loop: start=0, step=1, limit=4
    $region2: #{tpu_custom_call.1} parent=1 // loop_pre_header
      _
    $region3: #{tpu_custom_call.1} parent=1 // loop_header
      %s17 = sphi 0, %s21
      %p18 = scmp.ge.s32.totalorder %s17, 4
      %s27 = sphi 0, %s29
      %s30 = sphi 0, %s27
      %s31 = sphi 0, %s30
      %s47 = sphi 0, %s31
      %s53 = sphi 0, %s55
      %s56 = sphi 0, %s53
      %s57 = sphi 0, %s56
      %s73 = sphi 0, %s57
      %s79 = sphi 0, %s81
      %s82 = sphi 0, %s79
      %s83 = sphi 0, %s82
      %s99 = sphi 0, %s83
    $region4: #{tpu_custom_call.1} parent=1 // loop_header_branch
      %20 = sbr.rel (%p18) target = $region8
    $region5: #{tpu_custom_call.1} parent=1 // loop_body
      %s22 = ssub.s32 %s17, 1
      %s23 = ssub.s32 %s17, 2
      %s24 = sadd.s32 %s17, 1
      %s25 = ssub.s32 %s17, %s24
      %p26 = scmp.eq.s32.totalorder %s25, 0
      %s28 = sadd.s32 %s27, 1
      %s29 = scalar_select %p26, %s27, %s28
      %p32 = pneg %p26
      %p33 = scmp.eq.s32.totalorder %s17, 1
      %p34 = por %p32, %p33
      %p35 = scmp.ne.s32.totalorder %s27, %s30
      %p36 = scmp.eq.s32.totalorder %s17, 0
      %p37 = por %p35, %p36
      %p38 = scmp.ne.s32.totalorder %s27, %s30
      %p39 = scmp.eq.s32.totalorder %s22, 1
      %p40 = por %p38, %p39
      %p41 = scmp.ne.s32.totalorder %s30, %s31
      %p42 = scmp.eq.s32.totalorder %s22, 0
      %p43 = por %p41, %p42
      %p44 = scmp.ne.s32.totalorder %s30, %s31
      %p45 = scmp.eq.s32.totalorder %s23, 1
      %p46 = por %p44, %p45
      %p48 = scmp.ne.s32.totalorder %s31, %s47
      %p49 = scmp.eq.s32.totalorder %s23, 0
      %p50 = por %p48, %p49
      %s51 = ssub.s32 %s17, %s24
      %p52 = scmp.eq.s32.totalorder %s51, 0
      %s54 = sadd.s32 %s53, 1
      %s55 = scalar_select %p52, %s53, %s54
      %p58 = pneg %p52
      %p59 = scmp.eq.s32.totalorder %s17, 1
      %p60 = por %p58, %p59
      %p61 = scmp.ne.s32.totalorder %s53, %s56
      %p62 = scmp.eq.s32.totalorder %s17, 0
      %p63 = por %p61, %p62
      %p64 = scmp.ne.s32.totalorder %s53, %s56
      %p65 = scmp.eq.s32.totalorder %s22, 1
      %p66 = por %p64, %p65
      %p67 = scmp.ne.s32.totalorder %s56, %s57
      %p68 = scmp.eq.s32.totalorder %s22, 0
      %p69 = por %p67, %p68
      %p70 = scmp.ne.s32.totalorder %s56, %s57
      %p71 = scmp.eq.s32.totalorder %s23, 1
      %p72 = por %p70, %p71
      %p74 = scmp.ne.s32.totalorder %s57, %s73
      %p75 = scmp.eq.s32.totalorder %s23, 0
      %p76 = por %p74, %p75
      %s77 = ssub.s32 %s17, %s24
      %p78 = scmp.eq.s32.totalorder %s77, 0
      %s80 = sadd.s32 %s79, 1
      %s81 = scalar_select %p78, %s79, %s80
      %p84 = pneg %p78
      %p85 = scmp.eq.s32.totalorder %s17, 1
      %p86 = por %p84, %p85
      %p87 = scmp.ne.s32.totalorder %s79, %s82
      %p88 = scmp.eq.s32.totalorder %s17, 0
      %p89 = por %p87, %p88
      %p90 = scmp.ne.s32.totalorder %s79, %s82
      %p91 = scmp.eq.s32.totalorder %s22, 1
      %p92 = por %p90, %p91
      %p93 = scmp.ne.s32.totalorder %s82, %s83
      %p94 = scmp.eq.s32.totalorder %s22, 0
      %p95 = por %p93, %p94
      %p96 = scmp.ne.s32.totalorder %s82, %s83
      %p97 = scmp.eq.s32.totalorder %s23, 1
      %p98 = por %p96, %p97
      %p100 = scmp.ne.s32.totalorder %s83, %s99
      %p101 = scmp.eq.s32.totalorder %s23, 0
      %p102 = por %p100, %p101
      %p103 = scmp.le.s32.totalorder 1, %s17
      %p104 = scmp.lt.s32.totalorder %s17, 3
      %p105 = pnand %p103, %p104
      %p106 = pneg %p105
      // Predicated region
      $region9: #{tpu_custom_call.1} parent=5 // pred_check
        _
      $region10: #{tpu_custom_call.1} parent=5 // pred_check_branch
        %108 = sbr.rel (%p105) target = $region12
      $region11: #{tpu_custom_call.1} parent=5 // pred_region
        %s109 = ssub.s32 %s17, 1
      $region12: #{tpu_custom_call.1} parent=5 // pred_fallthru
        _
      %p110 = scmp.lt.s32.totalorder %s17, 2
      // Predicated region
      $region13: #{tpu_custom_call.1} parent=5 // pred_check
        %p111 = pneg %p110
      $region14: #{tpu_custom_call.1} parent=5 // pred_check_branch
        %113 = sbr.rel (%p111) target = $region16
      $region15: #{tpu_custom_call.1} parent=5 // pred_region
        // Predicated region
        $region17: #{tpu_custom_call.1} parent=15 // pred_check
          %p114 = pneg %p37
        $region18: #{tpu_custom_call.1} parent=15 // pred_check_branch
          %116 = sbr.rel (%p114) target = $region20
        $region19: #{tpu_custom_call.1} parent=15 // pred_region
          %s117 = sand.u32 %s27, 1
          %s118 = scalar_lea.sflag [#allocation3], %s117
          %s119 = sand.u32 %s27, 1
          %s120 = smul.addr %s119, 8
          %s121 = scalar_lea.vmem [#allocation2], %s120
          %s123 = ssub.s32 128, 128
          %124 = vsyncadd %s118, %s123
          %s125 = smul.addr %s17, 128
          %s126 = scalar_lea.hbm %s0, %s125
          %s128 = sshll.u32 %s121, 4
          %s129 = int_to_ptr.vmem [resolvable:$true] %s128
          %131 = dma.hbm_to_vmem [thread:$0]  %s126, 128, %s129, %s118
        $region20: #{tpu_custom_call.1} parent=15 // pred_fallthru
          _
        // Predicated region
        $region21: #{tpu_custom_call.1} parent=15 // pred_check
          %p132 = pneg %p63
        $region22: #{tpu_custom_call.1} parent=15 // pred_check_branch
          %134 = sbr.rel (%p132) target = $region24
        $region23: #{tpu_custom_call.1} parent=15 // pred_region
          %s135 = sand.u32 %s53, 1
          %s136 = scalar_lea.sflag [#allocation6], %s135
          %s137 = sand.u32 %s53, 1
          %s138 = smul.addr %s137, 8
          %s139 = scalar_lea.vmem [#allocation5], %s138
          %s141 = ssub.s32 128, 128
          %142 = vsyncadd %s136, %s141
          %s143 = smul.addr %s17, 128
          %s144 = scalar_lea.hbm %s1, %s143
          %s146 = sshll.u32 %s139, 4
          %s147 = int_to_ptr.vmem [resolvable:$true] %s146
          %149 = dma.hbm_to_vmem [thread:$0]  %s144, 128, %s147, %s136
        $region24: #{tpu_custom_call.1} parent=15 // pred_fallthru
          _
      $region16: #{tpu_custom_call.1} parent=5 // pred_fallthru
        _
      %p150 = scmp.le.s32.totalorder 1, %s17
      %p151 = scmp.lt.s32.totalorder %s17, 3
      %p152 = pnand %p150, %p151
      %p153 = pneg %p152
      // Predicated region
      $region25: #{tpu_custom_call.1} parent=5 // pred_check
        _
      $region26: #{tpu_custom_call.1} parent=5 // pred_check_branch
        %155 = sbr.rel (%p152) target = $region28
      $region27: #{tpu_custom_call.1} parent=5 // pred_region
        %s156 = ssub.s32 %s17, 1
        %s157 = sand.u32 %s30, 1
        %s158 = scalar_lea.sflag [#allocation3], %s157
        %s159 = sand.u32 %s30, 1
        %s160 = smul.addr %s159, 8
        %s161 = scalar_lea.vmem [#allocation2], %s160
        // Predicated region
        $region29: #{tpu_custom_call.1} parent=27 // pred_check
          %p162 = pneg %p43
        $region30: #{tpu_custom_call.1} parent=27 // pred_check_branch
          %164 = sbr.rel (%p162) target = $region32
        $region31: #{tpu_custom_call.1} parent=27 // pred_region
          %165 = dma.done %s158, 128
        $region32: #{tpu_custom_call.1} parent=27 // pred_fallthru
          _
        %s166 = sand.u32 %s56, 1
        %s167 = scalar_lea.sflag [#allocation6], %s166
        %s168 = sand.u32 %s56, 1
        %s169 = smul.addr %s168, 8
        %s170 = scalar_lea.vmem [#allocation5], %s169
        // Predicated region
        $region33: #{tpu_custom_call.1} parent=27 // pred_check
          %p171 = pneg %p69
        $region34: #{tpu_custom_call.1} parent=27 // pred_check_branch
          %173 = sbr.rel (%p171) target = $region36
        $region35: #{tpu_custom_call.1} parent=27 // pred_region
          %174 = dma.done %s167, 128
        $region36: #{tpu_custom_call.1} parent=27 // pred_fallthru
          _
        %s175 = sand.u32 %s30, 1
        %s176 = scalar_lea.sflag [#allocation3], %s175
        %s177 = sand.u32 %s30, 1
        %s178 = smul.addr %s177, 8
        %s179 = scalar_lea.vmem [#allocation2], %s178
        %p180 = pneg %p43
        %p181 = pneg %p40
        %s182 = sand.u32 %s56, 1
        %s183 = scalar_lea.sflag [#allocation6], %s182
        %s184 = sand.u32 %s56, 1
        %s185 = smul.addr %s184, 8
        %s186 = scalar_lea.vmem [#allocation5], %s185
        %p187 = pneg %p69
        %p188 = pneg %p66
        %p189 = pneg %p95
        %p190 = pneg %p92
        %s191 = sand.u32 %s82, 1
        %s192 = scalar_lea.sflag [#allocation4], %s191
        %s193 = sand.u32 %s82, 1
        %s194 = smul.addr %s193, 8
        %s195 = scalar_lea.vmem [#allocation7], %s194
        %v196 = vld [vmem:[%s161] sm:$0xff]
        %v197 = vld [vmem:[%s170] sm:$0xff]
        %v198 = vsub.f32 %v196, %v197
        %v199 = vand.u32 2147483647, %v198
        %v200 = vmul.f32 %v199, 20.0
        %v201 = vsub.f32 %v200, 100.0
        %v202 = vmax.f32 %v201, 0.0
        %vm203 = vcmp.lt.f32.partialorder %v199, 10.0
        %v204 = vrsqrt.pop %v202
        %v205 = vmul.f32 %v202, %v204
        %vm206 = vcmp.eq.f32.partialorder %v202, inf
        %v207 = vsel %vm206, %v202, %v205
        %vm208 = vcmp.eq.f32.partialorder %v202, 0.0
        %v209 = vand.u32 %v202, 2147483648
        %v210 = vsel %vm208, %v209, %v207
        %v211 = vsel %vm203, %v199, %v210
        %212 = vst [vmem:[%s195] sm:$0xff] %v211
        %s213 = sand.u32 %s82, 1
        %s214 = scalar_lea.sflag [#allocation4], %s213
        %s215 = sand.u32 %s82, 1
        %s216 = smul.addr %s215, 8
        %s217 = scalar_lea.vmem [#allocation7], %s216
        // Predicated region
        $region37: #{tpu_custom_call.1} parent=27 // pred_check
          %p218 = pneg %p92
        $region38: #{tpu_custom_call.1} parent=27 // pred_check_branch
          %220 = sbr.rel (%p218) target = $region40
        $region39: #{tpu_custom_call.1} parent=27 // pred_region
          %s222 = ssub.s32 128, 128
          %223 = vsyncadd %s214, %s222
          %s224 = smul.addr %s22, 128
          %s225 = scalar_lea.hbm %s2, %s224
          %s227 = sshll.u32 %s217, 4
          %s228 = int_to_ptr.vmem [resolvable:$true] %s227
          %230 = dma.vmem_to_hbm [thread:$0]  %s228, 128, %s225, %s214
        $region40: #{tpu_custom_call.1} parent=27 // pred_fallthru
          _
      $region28: #{tpu_custom_call.1} parent=5 // pred_fallthru
        _
      %p231 = scmp.le.s32.totalorder 2, %s17
      // Predicated region
      $region41: #{tpu_custom_call.1} parent=5 // pred_check
        %p232 = pneg %p231
      $region42: #{tpu_custom_call.1} parent=5 // pred_check_branch
        %234 = sbr.rel (%p232) target = $region44
      $region43: #{tpu_custom_call.1} parent=5 // pred_region
        %s235 = ssub.s32 %s17, 2
        // Predicated region
        $region45: #{tpu_custom_call.1} parent=43 // pred_check
          %p236 = pneg %p98
        $region46: #{tpu_custom_call.1} parent=43 // pred_check_branch
          %238 = sbr.rel (%p236) target = $region48
        $region47: #{tpu_custom_call.1} parent=43 // pred_region
          %s239 = sand.u32 %s83, 1
          %s240 = scalar_lea.sflag [#allocation4], %s239
          %s241 = sand.u32 %s83, 1
          %s242 = smul.addr %s241, 8
          %s243 = scalar_lea.vmem [#allocation7], %s242
          %244 = dma.done %s240, 128
        $region48: #{tpu_custom_call.1} parent=43 // pred_fallthru
          _
      $region44: #{tpu_custom_call.1} parent=5 // pred_fallthru
        _
    $region6: #{tpu_custom_call.1} parent=1 // loop_footer
      %s21 = sadd.s32 1, %s17
    $region7: #{tpu_custom_call.1} parent=1 // loop_footer_branch
      %16 = sbr.rel target = $region3
    $region8: #{tpu_custom_call.1} parent=1 // loop_exit
      _
    %245 = vsyncpa [#allocation3], 1
    %s246 = scalar_lea.sflag [#allocation3], 1
    %247 = vsyncpa %s246, 1
    %248 = vsyncpa [#allocation6], 1
    %s249 = scalar_lea.sflag [#allocation6], 1
    %250 = vsyncpa %s249, 1
    %251 = vsyncpa [#allocation4], 1
    %s252 = scalar_lea.sflag [#allocation4], 1
    %253 = vsyncpa %s252, 1

</llo_original>
